<compile_context>
chip_gen: v6e
topology: v6e:2x2x1
jax: 0.10.0
libtpu: 0.0.40
codegen_flags: <defaults>
</compile_context>

<pallas_src>
import functools

import jax
import jax.numpy as jnp
import numpy as np
from jax import lax
from jax.experimental import pallas as pl
from jax.experimental.pallas import tpu as pltpu

# MXU-friendly tile targets (256-wide for v6e/v7x; still map fine on v5e's 4x128^2).
_TM, _TN, _TK = 256, 256, 512          # QKV linear tiles
_TKV = 512                             # attention KV tile
_MQ = 512                              # target n_rep * tq rows per attention step


def _round_up(x, m):
    return (x + m - 1) // m * m


def _tile_and_pad(dim, target):
    """Return (tile, padded_dim): one full-dim block if it fits, else `target`-sized
    tiles with the dim padded up to a multiple of `target`."""
    if dim <= target:
        return dim, dim
    return target, _round_up(dim, target)


def _pad_axis(x, axis, new_size, value=0.0):
    if x.shape[axis] == new_size:
        return x
    pads = [(0, 0)] * x.ndim
    pads[axis] = (0, new_size - x.shape[axis])
    return jnp.pad(x, pads, constant_values=value)


def _vmem_limit_bytes():
    # Leave headroom for compiler-internal scratch (v7x only has 64 MiB per TC).
    try:
        cap = pltpu.get_tpu_info().vmem_capacity_bytes
    except Exception:
        cap = 64 * 1024 * 1024          # conservative fallback (safe on every gen)
    return min(int(cap) * 3 // 4, 100 * 1024 * 1024)


# ----------------------------- QKV linear kernel -----------------------------
def _qkv_linear_kernel(x_ref, w_ref, b_ref, o_ref, acc_ref):
    k = pl.program_id(2)

    @pl.when(k == 0)
    def _():
        acc_ref[...] = jnp.zeros_like(acc_ref)

    # bf16 x bf16 -> f32 on the MXU.
    acc_ref[...] += jnp.dot(x_ref[...], w_ref[...],
                            preferred_element_type=jnp.float32)

    @pl.when(k == pl.num_programs(2) - 1)
    def _():
        o_ref[...] = (acc_ref[...] + b_ref[...]).astype(o_ref.dtype)


def qkv_linear(x2d, w, b):
    """x2d: [M, K] bf16, w: [K, N] bf16, b: [N] f32 -> [M, N] f32."""
    M, K = x2d.shape
    N = w.shape[1]
    tm, Mp = _tile_and_pad(M, _TM)
    tn, Np = _tile_and_pad(N, _TN)
    tk, Kp = _tile_and_pad(K, _TK)
    x2d = _pad_axis(_pad_axis(x2d, 0, Mp), 1, Kp)
    w = _pad_axis(_pad_axis(w, 0, Kp), 1, Np)
    b2 = _pad_axis(b.astype(jnp.float32).reshape(1, N), 1, Np)
    out = pl.pallas_call(
        _qkv_linear_kernel,
        out_shape=jax.ShapeDtypeStruct((Mp, Np), jnp.float32),
        grid=(Mp // tm, Np // tn, Kp // tk),
        in_specs=[
            pl.BlockSpec((tm, tk), lambda i, j, k: (i, k)),
            pl.BlockSpec((tk, tn), lambda i, j, k: (k, j)),
            pl.BlockSpec((1, tn), lambda i, j, k: (0, j)),
        ],
        out_specs=pl.BlockSpec((tm, tn), lambda i, j, k: (i, j)),
        scratch_shapes=[pltpu.VMEM((tm, tn), jnp.float32)],
        compiler_params=pltpu.CompilerParams(
            dimension_semantics=("parallel", "parallel", "arbitrary"),
            vmem_limit_bytes=_vmem_limit_bytes(),
        ),
    )(x2d, w, b2)
    return out[:M, :N]


# ----------------------------- attention kernel -------------------------------
def _attn_kernel(q_ref, k_ref, v_ref, msk_ref, o_ref, m_i, l_i, *, scale):
    kt = pl.program_id(3)
    n_rep, tq, d = q_ref.shape
    mrows = n_rep * tq

    @pl.when(kt == 0)
    def _():
        m_i[...] = jnp.full_like(m_i, -jnp.inf)
        l_i[...] = jnp.zeros_like(l_i)
        o_ref[...] = jnp.zeros_like(o_ref)

    q = q_ref[...].reshape(mrows, d)         # bf16; free reshape when tq % 16 == 0
    k = k_ref[...]                           # (tkv, d) bf16
    v = v_ref[...]                           # (tkv, d) bf16
    tkv = k.shape[0]

    # Q @ K^T: bf16 x bf16 -> f32 on the MXU, contracting the head dim (no transpose).
    s = lax.dot_general(q, k, (((1,), (1,)), ((), ())),
                        preferred_element_type=jnp.float32) * scale
    # Broadcast-add the (tq, tkv) mask over the n_rep query heads (no jnp.tile copies).
    mask = msk_ref[...].astype(jnp.float32)
    s = (s.reshape(n_rep, tq, tkv) + mask[None]).reshape(mrows, tkv)

    m_cur = jnp.max(s, axis=-1, keepdims=True)
    m_new = jnp.maximum(m_i[...], m_cur)
    alpha = jnp.exp(m_i[...] - m_new)
    p = jnp.exp(s - m_new)
    l_i[...] = alpha * l_i[...] + jnp.sum(p, axis=-1, keepdims=True)

    # P @ V in bf16 on the MXU; accumulate directly into the resident f32 output.
    pv = lax.dot_general(p.astype(jnp.bfloat16), v, (((1,), (0,)), ((), ())),
                         preferred_element_type=jnp.float32)
    o_prev = o_ref[...].reshape(mrows, d)
    o_ref[...] = (alpha * o_prev + pv).reshape(n_rep, tq, d)
    m_i[...] = m_new

    @pl.when(kt == pl.num_programs(3) - 1)
    def _():
        inv_l = pl.reciprocal(l_i[...], approx=True)
        o_ref[...] = (o_ref[...].reshape(mrows, d) * inv_l).reshape(n_rep, tq, d)


def masked_attention(qg, kg, vg, mask, *, scale):
    """qg: [B, n_kv, n_rep, S_q, D] bf16; kg, vg: [B, n_kv, S_kv, D] bf16;
    mask: [B, 1, S_q, S_kv] additive. Returns [B, n_kv, n_rep, S_q, D] f32."""
    B, n_kv, n_rep, S_q, D = qg.shape
    S_kv = kg.shape[2]
    tq_target = max(8, (_MQ // n_rep) // 8 * 8)
    tq, S_q_p = _tile_and_pad(S_q, tq_target)
    tkv, S_kv_p = _tile_and_pad(S_kv, _TKV)

    qg = _pad_axis(qg, 3, S_q_p)
    kg = _pad_axis(kg, 2, S_kv_p)
    vg = _pad_axis(vg, 2, S_kv_p)
    mask = mask.astype(jnp.bfloat16)                 # bf16 mask stream (half traffic)
    mask = _pad_axis(mask, 3, S_kv_p, value=-1e9)    # padded keys -> prob 0
    mask = _pad_axis(mask, 2, S_q_p, value=0.0)      # padded queries -> sliced off

    kernel = functools.partial(_attn_kernel, scale=scale)
    out = pl.pallas_call(
        kernel,
        out_shape=jax.ShapeDtypeStruct((B, n_kv, n_rep, S_q_p, D), jnp.float32),
        grid=(B, n_kv, S_q_p // tq, S_kv_p // tkv),
        in_specs=[
            pl.BlockSpec((None, None, n_rep, tq, D),
                         lambda b, g, qi, ki: (b, g, 0, qi, 0)),
            pl.BlockSpec((None, None, tkv, D), lambda b, g, qi, ki: (b, g, ki, 0)),
            pl.BlockSpec((None, None, tkv, D), lambda b, g, qi, ki: (b, g, ki, 0)),
            pl.BlockSpec((None, None, tq, tkv), lambda b, g, qi, ki: (b, 0, qi, ki)),
        ],
        out_specs=pl.BlockSpec((None, None, n_rep, tq, D),
                               lambda b, g, qi, ki: (b, g, 0, qi, 0)),
        scratch_shapes=[
            pltpu.VMEM((n_rep * tq, 1), jnp.float32),   # running max
            pltpu.VMEM((n_rep * tq, 1), jnp.float32),   # running denominator
        ],
        compiler_params=pltpu.CompilerParams(
            dimension_semantics=("parallel", "parallel", "parallel", "arbitrary"),
            vmem_limit_bytes=_vmem_limit_bytes(),
        ),
    )(qg, kg, vg, mask)
    return out[:, :, :, :S_q, :]


# ----------------------------- full forward (glue) ----------------------------
def masked_mha_forward(params, input_t, key_cache, value_cache, attention_mask,
                       *, n_head, n_kv, head_dim):
    """MaskedMHA.forward(..., indirect_access_kv_cache=False, enable_linear=True,
    fp8=False) with the module's bf16-autocast linear (f32 accumulation)."""
    B, S, H = input_t.shape
    n_rep = n_head // n_kv
    w = params["w"].astype(jnp.bfloat16)
    b = params["b"]

    # Fused QKV projection: tiled Pallas matmul, bf16 into the MXU, f32 out.
    fused = qkv_linear(input_t.reshape(B * S, H).astype(jnp.bfloat16), w, b)
    fused = fused.reshape(B, S, -1)

    q_end = n_head * head_dim
    k_end = (n_head + n_kv) * head_dim
    query = fused[:, :, :q_end].reshape(B, S, n_kv, n_rep, head_dim)
    key = fused[:, :, q_end:k_end].reshape(B, S, n_kv, head_dim)
    value = fused[:, :, k_end:].reshape(B, S, n_kv, head_dim)

    # Simulated fp8 KV quantization: .to(float8_e5m2).to(origin_type)
    q8 = lambda t: t.astype(jnp.float8_e5m2).astype(t.dtype)
    key, value = q8(key), q8(value)
    if key_cache is not None:
        key = jnp.concatenate([q8(key_cache), key], axis=1)
        value = jnp.concatenate([q8(value_cache), value], axis=1)
    new_key_cache, new_value_cache = key, value      # module returns f32 caches
    # TODO(synk): write new K/V into the caller's cache via input_output_aliases
    # instead of materializing the concatenate / emit grouped Q/K/V straight from
    # the QKV kernel to remove the slice/transpose glue passes below.

    # Group query heads by KV head: [B, S, n_kv, n_rep, D] -> [B, n_kv, n_rep, S, D].
    qg = jnp.transpose(query, (0, 2, 3, 1, 4)).astype(jnp.bfloat16)
    # K/V streamed bf16 (exact after the fp8 round-trip): [B, n_kv, S_kv, D].
    # TODO(synk): stream real float8_e5m2 into the MXU on v7x.
    kg = jnp.transpose(key, (0, 2, 1, 3)).astype(jnp.bfloat16)
    vg = jnp.transpose(value, (0, 2, 1, 3)).astype(jnp.bfloat16)

    scale = 1.0 / (head_dim ** 0.5)
    out = masked_attention(qg, kg, vg, attention_mask, scale=scale)
    # [B, n_kv, n_rep, S, D] -> [B, n_head, S, D]: pure reshape, no transpose.
    attn_out = out.reshape(B, n_head, S, head_dim)
    # TODO(synk): indirect_access_kv_cache=True path (torch_ipex fused op with
    # beam_idx / offset / max_position) is not implemented; this is the dense path.
    return attn_out, None, new_key_cache, new_value_cache, None


# ----------------------------- reference (pure JAX) ----------------------------
def _reference(params, input_t, key_cache, value_cache, attention_mask,
               *, n_head, n_kv, head_dim):
    B, S, H = input_t.shape
    # Linear mirrors the module's bf16-autocast path (bf16 inputs, f32 accumulate).
    x = input_t.astype(jnp.bfloat16).astype(jnp.float32).reshape(B * S, H)
    w = params["w"].astype(jnp.bfloat16).astype(jnp.float32)
    fused = (jnp.dot(x, w, precision="highest") + params["b"]).reshape(B, S, -1)
    q_end = n_head * head_dim
    k_end = (n_head + n_kv) * head_dim
    q = fused[:, :, :q_end].reshape(B, S, n_head, head_dim)
    k = fused[:, :, q_end:k_end].reshape(B, S, n_kv, head_dim)
    v = fused[:, :, k_end:].reshape(B, S, n_kv, head_dim)
    q8 = lambda t: t.astype(jnp.float8_e5m2).astype(t.dtype)
    k, v = q8(k), q8(v)
    k = jnp.concatenate([q8(key_cache), k], axis=1)
    v = jnp.concatenate([q8(value_cache), v], axis=1)
    n_rep = n_head // n_kv
    k = jnp.repeat(k, n_rep, axis=2)
    v = jnp.repeat(v, n_rep, axis=2)
    q, k, v = (jnp.transpose(t, (0, 2, 1, 3)) for t in (q, k, v))
    scores = jnp.einsum("bhqd,bhkd->bhqk", q, k, precision="highest") / head_dim ** 0.5
    scores = scores + attention_mask
    probs = jax.nn.softmax(scores, axis=-1)
    return jnp.einsum("bhqk,bhkd->bhqd", probs, v, precision="highest")


# ----------------------------------- main --------------------------------------
if __name__ == "__main__":
    B, S, CACHE = 2, 8, 8
    HIDDEN, N_HEAD, N_KV, HEAD_DIM = 32, 4, 2, 8
    OUT = (N_KV * 2 + N_HEAD) * HEAD_DIM

    key = jax.random.PRNGKey(0)
    k_w, k_b, k_x, k_kc, k_vc = jax.random.split(key, 5)
    params = {
        "w": jax.random.normal(k_w, (HIDDEN, OUT), jnp.float32) * 0.02,
        "b": jax.random.normal(k_b, (OUT,), jnp.float32) * 0.02,
    }
    input_t = jax.random.normal(k_x, (B, S, HIDDEN), jnp.float32)
    key_cache = jax.random.normal(k_kc, (B, CACHE, N_KV, HEAD_DIM), jnp.float32)
    value_cache = jax.random.normal(k_vc, (B, CACHE, N_KV, HEAD_DIM), jnp.float32)

    # mask [B, 1, S_q, S_kv]: cache tokens visible; causal over new tokens.
    S_KV = CACHE + S
    q_pos = CACHE + jnp.arange(S)[:, None]
    kv_pos = jnp.arange(S_KV)[None, :]
    mask = jnp.where(kv_pos <= q_pos, 0.0, -1e9).astype(jnp.float32)
    attention_mask = jnp.broadcast_to(mask, (B, 1, S, S_KV))

    fwd = jax.jit(functools.partial(masked_mha_forward, n_head=N_HEAD,
                                    n_kv=N_KV, head_dim=HEAD_DIM))
    out, _, new_kc, new_vc, _ = fwd(params, input_t, key_cache, value_cache,
                                    attention_mask)
    jax.block_until_ready(out)

    ref = _reference(params, input_t, key_cache, value_cache, attention_mask,
                     n_head=N_HEAD, n_kv=N_KV, head_dim=HEAD_DIM)
    # Tolerance covers bf16 MXU inputs (Q/K/V/P) + approx reciprocal vs f32 reference.
    np.testing.assert_allclose(np.asarray(out), np.asarray(ref),
                               atol=5e-3, rtol=5e-3)
    assert out.shape == (B, N_HEAD, S, HEAD_DIM)
    assert new_kc.shape == (B, S_KV, N_KV, HEAD_DIM)
    assert new_vc.shape == (B, S_KV, N_KV, HEAD_DIM)
    print("KERNEL_OK")
</pallas_src>

<mosaic_0001>
module attributes {stable_mosaic.version = 11 : i64} {
  func.func @_qkv_linear_kernel(%arg0: i32, %arg1: i32, %arg2: i32, %arg3: memref<16x32xbf16, #tpu.memory_space<vmem>>, %arg4: memref<32x64xbf16, #tpu.memory_space<vmem>>, %arg5: memref<1x64xf32, #tpu.memory_space<vmem>>, %arg6: memref<16x64xf32, #tpu.memory_space<vmem>>, %arg7: memref<16x64xf32, #tpu.memory_space<vmem>>) attributes {dimension_semantics = [#tpu.dimension_semantics<parallel>, #tpu.dimension_semantics<parallel>, #tpu.dimension_semantics<arbitrary>], iteration_bounds = array<i64: 1, 1, 1>, scalar_prefetch = 0 : i64, scratch_operands = 1 : i64, tpu.core_type = #tpu.core_type<tc>, window_params = [{transform_indices = @transform_0, window_bounds = array<i64: 16, 32>}, {transform_indices = @transform_1, window_bounds = array<i64: 32, 64>}, {transform_indices = @transform_2, window_bounds = array<i64: 1, 64>}, {transform_indices = @transform_3, window_bounds = array<i64: 16, 64>}]} {
    %c0_i32 = arith.constant 0 : i32
    %0 = arith.cmpi eq, %arg2, %c0_i32 : i32
    %1 = arith.extui %0 : i1 to i32
    %c0_i32_0 = arith.constant 0 : i32
    %2 = arith.cmpi ne, %1, %c0_i32_0 : i32
    scf.if %2 {
      %cst_10 = arith.constant 0.000000e+00 : f32
      %12 = vector.broadcast %cst_10 : f32 to vector<16x64xf32>
      %c0_11 = arith.constant 0 : index
      %c0_12 = arith.constant 0 : index
      %13 = vector.load %arg7[%c0_11, %c0_12] : memref<16x64xf32, #tpu.memory_space<vmem>>, vector<16x64xf32>
      tpu.vector_store %arg7[%c0_11, %c0_12], %12 {strides = array<i32>} : memref<16x64xf32, #tpu.memory_space<vmem>>, vector<16x64xf32>,
    } else {
    }
    %c0 = arith.constant 0 : index
    %c0_1 = arith.constant 0 : index
    %3 = vector.load %arg7[%c0, %c0_1] : memref<16x64xf32, #tpu.memory_space<vmem>>, vector<16x64xf32>
    %c0_2 = arith.constant 0 : index
    %c0_3 = arith.constant 0 : index
    %4 = vector.load %arg3[%c0_2, %c0_3] : memref<16x32xbf16, #tpu.memory_space<vmem>>, vector<16x32xbf16>
    %c0_4 = arith.constant 0 : index
    %c0_5 = arith.constant 0 : index
    %5 = vector.load %arg4[%c0_4, %c0_5] : memref<32x64xbf16, #tpu.memory_space<vmem>>, vector<32x64xbf16>
    %cst = arith.constant dense<0.000000e+00> : vector<16x64xf32>
    %6 = tpu.matmul %4, %5, %cst {dimension_numbers = #tpu.dot_dimension_numbers<[1], [0], [0], [1], [0, 0, 1, 1], [], []>} : vector<16x32xbf16>, vector<32x64xbf16>, vector<16x64xf32> -> vector<16x64xf32>
    %7 = arith.addf %3, %6 : vector<16x64xf32>
    %c0_6 = arith.constant 0 : index
    %c0_7 = arith.constant 0 : index
    %8 = vector.load %arg7[%c0_6, %c0_7] : memref<16x64xf32, #tpu.memory_space<vmem>>, vector<16x64xf32>
    tpu.vector_store %arg7[%c0_6, %c0_7], %7 {strides = array<i32>} : memref<16x64xf32, #tpu.memory_space<vmem>>, vector<16x64xf32>,
    %c0_i32_8 = arith.constant 0 : i32
    %9 = arith.cmpi eq, %arg2, %c0_i32_8 : i32
    %10 = arith.extui %9 : i1 to i32
    %c0_i32_9 = arith.constant 0 : i32
    %11 = arith.cmpi ne, %10, %c0_i32_9 : i32
    scf.if %11 {
      %c0_10 = arith.constant 0 : index
      %c0_11 = arith.constant 0 : index
      %12 = vector.load %arg7[%c0_10, %c0_11] : memref<16x64xf32, #tpu.memory_space<vmem>>, vector<16x64xf32>
      %c0_12 = arith.constant 0 : index
      %c0_13 = arith.constant 0 : index
      %13 = vector.load %arg5[%c0_12, %c0_13] : memref<1x64xf32, #tpu.memory_space<vmem>>, vector<1x64xf32>
      %14 = vector.broadcast %13 : vector<1x64xf32> to vector<16x64xf32>
      %15 = arith.addf %12, %14 : vector<16x64xf32>
      %c0_14 = arith.constant 0 : index
      %c0_15 = arith.constant 0 : index
      %16 = vector.load %arg6[%c0_14, %c0_15] : memref<16x64xf32, #tpu.memory_space<vmem>>, vector<16x64xf32>
      tpu.vector_store %arg6[%c0_14, %c0_15], %15 {strides = array<i32>} : memref<16x64xf32, #tpu.memory_space<vmem>>, vector<16x64xf32>,
    } else {
    }
    return
  }
  func.func @transform_0(%arg0: i32, %arg1: i32, %arg2: i32) -> (i32, i32) {
    %c0_i32 = arith.constant 0 : i32
    return %arg0, %arg2 : i32, i32
  }
  func.func @transform_1(%arg0: i32, %arg1: i32, %arg2: i32) -> (i32, i32) {
    %c0_i32 = arith.constant 0 : i32
    return %arg2, %arg1 : i32, i32
  }
  func.func @transform_2(%arg0: i32, %arg1: i32, %arg2: i32) -> (i32, i32) {
    %c0_i32 = arith.constant 0 : i32
    %c0_i32_0 = arith.constant 0 : i32
    return %c0_i32, %arg1 : i32, i32
  }
  func.func @transform_3(%arg0: i32, %arg1: i32, %arg2: i32) -> (i32, i32) {
    %c0_i32 = arith.constant 0 : i32
    return %arg0, %arg1 : i32, i32
  }
}

module attributes {stable_mosaic.version = 11 : i64} {
  func.func @_attn_kernel(%arg0: i32, %arg1: i32, %arg2: i32, %arg3: i32, %arg4: memref<1x1x2x8x8xbf16, #tpu.memory_space<vmem>>, %arg5: memref<1x1x16x8xbf16, #tpu.memory_space<vmem>>, %arg6: memref<1x1x16x8xbf16, #tpu.memory_space<vmem>>, %arg7: memref<1x1x8x16xbf16, #tpu.memory_space<vmem>>, %arg8: memref<1x1x2x8x8xf32, #tpu.memory_space<vmem>>, %arg9: memref<16x1xf32, #tpu.memory_space<vmem>>, %arg10: memref<16x1xf32, #tpu.memory_space<vmem>>) attributes {dimension_semantics = [#tpu.dimension_semantics<parallel>, #tpu.dimension_semantics<parallel>, #tpu.dimension_semantics<parallel>, #tpu.dimension_semantics<arbitrary>], iteration_bounds = array<i64: 2, 2, 1, 1>, scalar_prefetch = 0 : i64, scratch_operands = 2 : i64, tpu.core_type = #tpu.core_type<tc>, window_params = [{transform_indices = @transform_0, window_bounds = array<i64: 1, 1, 2, 8, 8>}, {transform_indices = @transform_1, window_bounds = array<i64: 1, 1, 16, 8>}, {transform_indices = @transform_2, window_bounds = array<i64: 1, 1, 16, 8>}, {transform_indices = @transform_3, window_bounds = array<i64: 1, 1, 8, 16>}, {transform_indices = @transform_4, window_bounds = array<i64: 1, 1, 2, 8, 8>}]} {
    %c0_i32 = arith.constant 0 : i32
    %0 = arith.cmpi eq, %arg3, %c0_i32 : i32
    %1 = arith.extui %0 : i1 to i32
    %c0_i32_0 = arith.constant 0 : i32
    %2 = arith.cmpi ne, %1, %c0_i32_0 : i32
    scf.if %2 {
      %cst_43 = arith.constant 0xFF800000 : f32
      %53 = vector.broadcast %cst_43 : f32 to vector<16x1xf32>
      %c0_44 = arith.constant 0 : index
      %c0_45 = arith.constant 0 : index
      %54 = vector.load %arg9[%c0_44, %c0_45] : memref<16x1xf32, #tpu.memory_space<vmem>>, vector<16x1xf32>
      tpu.vector_store %arg9[%c0_44, %c0_45], %53 {strides = array<i32>} : memref<16x1xf32, #tpu.memory_space<vmem>>, vector<16x1xf32>,
      %cst_46 = arith.constant 0.000000e+00 : f32
      %55 = vector.broadcast %cst_46 : f32 to vector<16x1xf32>
      %c0_47 = arith.constant 0 : index
      %c0_48 = arith.constant 0 : index
      %56 = vector.load %arg10[%c0_47, %c0_48] : memref<16x1xf32, #tpu.memory_space<vmem>>, vector<16x1xf32>
      tpu.vector_store %arg10[%c0_47, %c0_48], %55 {strides = array<i32>} : memref<16x1xf32, #tpu.memory_space<vmem>>, vector<16x1xf32>,
      %cst_49 = arith.constant 0.000000e+00 : f32
      %57 = vector.broadcast %cst_49 : f32 to vector<2x8x8xf32>
      %c0_50 = arith.constant 0 : index
      %c0_51 = arith.constant 0 : index
      %c0_52 = arith.constant 0 : index
      %c0_53 = arith.constant 0 : index
      %c0_54 = arith.constant 0 : index
      %58 = vector.load %arg8[%c0_50, %c0_51, %c0_52, %c0_53, %c0_54] : memref<1x1x2x8x8xf32, #tpu.memory_space<vmem>>, vector<1x1x2x8x8xf32>
      %59 = vector.shape_cast %58 : vector<1x1x2x8x8xf32> to vector<2x8x8xf32>
      %60 = vector.shape_cast %57 : vector<2x8x8xf32> to vector<1x1x2x8x8xf32>
      tpu.vector_store %arg8[%c0_50, %c0_51, %c0_52, %c0_53, %c0_54], %60 {strides = array<i32>} : memref<1x1x2x8x8xf32, #tpu.memory_space<vmem>>, vector<1x1x2x8x8xf32>,
    } else {
    }
    %c0 = arith.constant 0 : index
    %c0_1 = arith.constant 0 : index
    %c0_2 = arith.constant 0 : index
    %c0_3 = arith.constant 0 : index
    %c0_4 = arith.constant 0 : index
    %3 = vector.load %arg4[%c0, %c0_1, %c0_2, %c0_3, %c0_4] : memref<1x1x2x8x8xbf16, #tpu.memory_space<vmem>>, vector<1x1x2x8x8xbf16>
    %4 = vector.shape_cast %3 : vector<1x1x2x8x8xbf16> to vector<2x8x8xbf16>
    %5 = vector.shape_cast %4 : vector<2x8x8xbf16> to vector<16x8xbf16>
    %c0_5 = arith.constant 0 : index
    %c0_6 = arith.constant 0 : index
    %c0_7 = arith.constant 0 : index
    %c0_8 = arith.constant 0 : index
    %6 = vector.load %arg5[%c0_5, %c0_6, %c0_7, %c0_8] : memref<1x1x16x8xbf16, #tpu.memory_space<vmem>>, vector<1x1x16x8xbf16>
    %7 = vector.shape_cast %6 : vector<1x1x16x8xbf16> to vector<16x8xbf16>
    %c0_9 = arith.constant 0 : index
    %c0_10 = arith.constant 0 : index
    %c0_11 = arith.constant 0 : index
    %c0_12 = arith.constant 0 : index
    %8 = vector.load %arg6[%c0_9, %c0_10, %c0_11, %c0_12] : memref<1x1x16x8xbf16, #tpu.memory_space<vmem>>, vector<1x1x16x8xbf16>
    %9 = vector.shape_cast %8 : vector<1x1x16x8xbf16> to vector<16x8xbf16>
    %cst = arith.constant dense<0.000000e+00> : vector<16x16xf32>
    %10 = tpu.matmul %5, %7, %cst {dimension_numbers = #tpu.dot_dimension_numbers<[1], [1], [0], [0], [0, 0, 1, 0], [], []>} : vector<16x8xbf16>, vector<16x8xbf16>, vector<16x16xf32> -> vector<16x16xf32>
    %cst_13 = arith.constant 0.353553385 : f32
    %11 = vector.broadcast %cst_13 : f32 to vector<16x16xf32>
    %12 = arith.mulf %10, %11 : vector<16x16xf32>
    %c0_14 = arith.constant 0 : index
    %c0_15 = arith.constant 0 : index
    %c0_16 = arith.constant 0 : index
    %c0_17 = arith.constant 0 : index
    %13 = vector.load %arg7[%c0_14, %c0_15, %c0_16, %c0_17] : memref<1x1x8x16xbf16, #tpu.memory_space<vmem>>, vector<1x1x8x16xbf16>
    %14 = vector.shape_cast %13 : vector<1x1x8x16xbf16> to vector<8x16xbf16>
    %15 = arith.extf %14 : vector<8x16xbf16> to vector<8x16xf32>
    %16 = vector.shape_cast %12 : vector<16x16xf32> to vector<2x8x16xf32>
    %17 = vector.shape_cast %15 : vector<8x16xf32> to vector<1x8x16xf32>
    %18 = vector.broadcast %17 : vector<1x8x16xf32> to vector<2x8x16xf32>
    %19 = arith.addf %16, %18 : vector<2x8x16xf32>
    %20 = vector.shape_cast %19 : vector<2x8x16xf32> to vector<16x16xf32>
    %cst_18 = arith.constant dense<0xFF800000> : vector<16xf32>
    %21 = vector.multi_reduction <maximumf>, %20, %cst_18 [1] : vector<16x16xf32> to vector<16xf32>
    %22 = vector.shape_cast %21 : vector<16xf32> to vector<16x1xf32>
    %c0_19 = arith.constant 0 : index
    %c0_20 = arith.constant 0 : index
    %23 = vector.load %arg9[%c0_19, %c0_20] : memref<16x1xf32, #tpu.memory_space<vmem>>, vector<16x1xf32>
    %24 = arith.maximumf %23, %22 : vector<16x1xf32>
    %c0_21 = arith.constant 0 : index
    %c0_22 = arith.constant 0 : index
    %25 = vector.load %arg9[%c0_21, %c0_22] : memref<16x1xf32, #tpu.memory_space<vmem>>, vector<16x1xf32>
    %26 = arith.subf %25, %24 : vector<16x1xf32>
    %27 = math.exp %26 : vector<16x1xf32>
    %28 = vector.broadcast %24 : vector<16x1xf32> to vector<16x16xf32>
    %29 = arith.subf %20, %28 : vector<16x16xf32>
    %30 = math.exp %29 : vector<16x16xf32>
    %c0_23 = arith.constant 0 : index
    %c0_24 = arith.constant 0 : index
    %31 = vector.load %arg10[%c0_23, %c0_24] : memref<16x1xf32, #tpu.memory_space<vmem>>, vector<16x1xf32>
    %32 = arith.mulf %27, %31 : vector<16x1xf32>
    %cst_25 = arith.constant dense<0.000000e+00> : vector<16xf32>
    %33 = vector.multi_reduction <add>, %30, %cst_25 [1] : vector<16x16xf32> to vector<16xf32>
    %34 = vector.shape_cast %33 : vector<16xf32> to vector<16x1xf32>
    %35 = arith.addf %32, %34 : vector<16x1xf32>
    %c0_26 = arith.constant 0 : index
    %c0_27 = arith.constant 0 : index
    %36 = vector.load %arg10[%c0_26, %c0_27] : memref<16x1xf32, #tpu.memory_space<vmem>>, vector<16x1xf32>
    tpu.vector_store %arg10[%c0_26, %c0_27], %35 {strides = array<i32>} : memref<16x1xf32, #tpu.memory_space<vmem>>, vector<16x1xf32>,
    %37 = arith.truncf %30 : vector<16x16xf32> to vector<16x16xbf16>
    %cst_28 = arith.constant dense<0.000000e+00> : vector<16x8xf32>
    %38 = tpu.matmul %37, %9, %cst_28 {dimension_numbers = #tpu.dot_dimension_numbers<[1], [0], [0], [1], [0, 0, 1, 1], [], []>} : vector<16x16xbf16>, vector<16x8xbf16>, vector<16x8xf32> -> vector<16x8xf32>
    %c0_29 = arith.constant 0 : index
    %c0_30 = arith.constant 0 : index
    %c0_31 = arith.constant 0 : index
    %c0_32 = arith.constant 0 : index
    %c0_33 = arith.constant 0 : index
    %39 = vector.load %arg8[%c0_29, %c0_30, %c0_31, %c0_32, %c0_33] : memref<1x1x2x8x8xf32, #tpu.memory_space<vmem>>, vector<1x1x2x8x8xf32>
    %40 = vector.shape_cast %39 : vector<1x1x2x8x8xf32> to vector<2x8x8xf32>
    %41 = vector.shape_cast %40 : vector<2x8x8xf32> to vector<16x8xf32>
    %42 = vector.broadcast %27 : vector<16x1xf32> to vector<16x8xf32>
    %43 = arith.mulf %42, %41 : vector<16x8xf32>
    %44 = arith.addf %43, %38 : vector<16x8xf32>
    %45 = vector.shape_cast %44 : vector<16x8xf32> to vector<2x8x8xf32>
    %c0_34 = arith.constant 0 : index
    %c0_35 = arith.constant 0 : index
    %c0_36 = arith.constant 0 : index
    %c0_37 = arith.constant 0 : index
    %c0_38 = arith.constant 0 : index
    %46 = vector.load %arg8[%c0_34, %c0_35, %c0_36, %c0_37, %c0_38] : memref<1x1x2x8x8xf32, #tpu.memory_space<vmem>>, vector<1x1x2x8x8xf32>
    %47 = vector.shape_cast %46 : vector<1x1x2x8x8xf32> to vector<2x8x8xf32>
    %48 = vector.shape_cast %45 : vector<2x8x8xf32> to vector<1x1x2x8x8xf32>
    tpu.vector_store %arg8[%c0_34, %c0_35, %c0_36, %c0_37, %c0_38], %48 {strides = array<i32>} : memref<1x1x2x8x8xf32, #tpu.memory_space<vmem>>, vector<1x1x2x8x8xf32>,
    %c0_39 = arith.constant 0 : index
    %c0_40 = arith.constant 0 : index
    %49 = vector.load %arg9[%c0_39, %c0_40] : memref<16x1xf32, #tpu.memory_space<vmem>>, vector<16x1xf32>
    tpu.vector_store %arg9[%c0_39, %c0_40], %24 {strides = array<i32>} : memref<16x1xf32, #tpu.memory_space<vmem>>, vector<16x1xf32>,
    %c0_i32_41 = arith.constant 0 : i32
    %50 = arith.cmpi eq, %arg3, %c0_i32_41 : i32
    %51 = arith.extui %50 : i1 to i32
    %c0_i32_42 = arith.constant 0 : i32
    %52 = arith.cmpi ne, %51, %c0_i32_42 : i32
    scf.if %52 {
      %c0_43 = arith.constant 0 : index
      %c0_44 = arith.constant 0 : index
      %53 = vector.load %arg10[%c0_43, %c0_44] : memref<16x1xf32, #tpu.memory_space<vmem>>, vector<16x1xf32>
      %54 = tpu.reciprocal %53 {approx = true} : vector<16x1xf32> -> vector<16x1xf32>
      %c0_45 = arith.constant 0 : index
      %c0_46 = arith.constant 0 : index
      %c0_47 = arith.constant 0 : index
      %c0_48 = arith.constant 0 : index
      %c0_49 = arith.constant 0 : index
      %55 = vector.load %arg8[%c0_45, %c0_46, %c0_47, %c0_48, %c0_49] : memref<1x1x2x8x8xf32, #tpu.memory_space<vmem>>, vector<1x1x2x8x8xf32>
      %56 = vector.shape_cast %55 : vector<1x1x2x8x8xf32> to vector<2x8x8xf32>
      %57 = vector.shape_cast %56 : vector<2x8x8xf32> to vector<16x8xf32>
      %58 = vector.broadcast %54 : vector<16x1xf32> to vector<16x8xf32>
      %59 = arith.mulf %57, %58 : vector<16x8xf32>
      %60 = vector.shape_cast %59 : vector<16x8xf32> to vector<2x8x8xf32>
      %c0_50 = arith.constant 0 : index
      %c0_51 = arith.constant 0 : index
      %c0_52 = arith.constant 0 : index
      %c0_53 = arith.constant 0 : index
      %c0_54 = arith.constant 0 : index
      %61 = vector.load %arg8[%c0_50, %c0_51, %c0_52, %c0_53, %c0_54] : memref<1x1x2x8x8xf32, #tpu.memory_space<vmem>>, vector<1x1x2x8x8xf32>
      %62 = vector.shape_cast %61 : vector<1x1x2x8x8xf32> to vector<2x8x8xf32>
      %63 = vector.shape_cast %60 : vector<2x8x8xf32> to vector<1x1x2x8x8xf32>
      tpu.vector_store %arg8[%c0_50, %c0_51, %c0_52, %c0_53, %c0_54], %63 {strides = array<i32>} : memref<1x1x2x8x8xf32, #tpu.memory_space<vmem>>, vector<1x1x2x8x8xf32>,
    } else {
    }
    return
  }
  func.func @transform_0(%arg0: i32, %arg1: i32, %arg2: i32, %arg3: i32) -> (i32, i32, i32, i32, i32) {
    %c0_i32 = arith.constant 0 : i32
    %c0_i32_0 = arith.constant 0 : i32
    %c0_i32_1 = arith.constant 0 : i32
    return %arg0, %arg1, %c0_i32, %arg2, %c0_i32_0 : i32, i32, i32, i32, i32
  }
  func.func @transform_1(%arg0: i32, %arg1: i32, %arg2: i32, %arg3: i32) -> (i32, i32, i32, i32) {
    %c0_i32 = arith.constant 0 : i32
    %c0_i32_0 = arith.constant 0 : i32
    return %arg0, %arg1, %arg3, %c0_i32 : i32, i32, i32, i32
  }
  func.func @transform_2(%arg0: i32, %arg1: i32, %arg2: i32, %arg3: i32) -> (i32, i32, i32, i32) {
    %c0_i32 = arith.constant 0 : i32
    %c0_i32_0 = arith.constant 0 : i32
    return %arg0, %arg1, %arg3, %c0_i32 : i32, i32, i32, i32
  }
  func.func @transform_3(%arg0: i32, %arg1: i32, %arg2: i32, %arg3: i32) -> (i32, i32, i32, i32) {
    %c0_i32 = arith.constant 0 : i32
    %c0_i32_0 = arith.constant 0 : i32
    return %arg0, %c0_i32, %arg2, %arg3 : i32, i32, i32, i32
  }
  func.func @transform_4(%arg0: i32, %arg1: i32, %arg2: i32, %arg3: i32) -> (i32, i32, i32, i32, i32) {
    %c0_i32 = arith.constant 0 : i32
    %c0_i32_0 = arith.constant 0 : i32
    %c0_i32_1 = arith.constant 0 : i32
    return %arg0, %arg1, %c0_i32, %arg2, %c0_i32_0 : i32, i32, i32, i32, i32
  }
}

</mosaic_0001>

<llo_original>
// kernel: masked_mha_forward.2
$region0: #{masked_mha_forward.2}
  #allocation0 [shape = 'u32[]', space=smem, size = 0x4, offset = 0x4, fixed_abs, tag = 'smem constant byte address 0x4 - core index']
  #allocation1 [shape = 'u32[144,128]{1,0:T(1,128)}', space=vmem, size = 0x12000, scoped, tag = 'internal scratch']
  #allocation2 [shape = 'f32[16,64]{1,0:T(8,128)}', space=vmem, size = 0x2000, scoped, tag = 'scratch operand']
  %s0 = inlined_call_operand.vmem [shape: bf16[16,32], index: 0, kind: input, shape index: {}]
  %s1 = inlined_call_operand.vmem [shape: bf16[32,64], index: 1, kind: input, shape index: {}]
  %s2 = inlined_call_operand.vmem [shape: f32[1,64], index: 2, kind: input, shape index: {}]
  %s3 = inlined_call_operand.vmem [shape: f32[16,64], index: 3, kind: output, shape index: {}]
  %s4 = sld [smem:[#allocation0]]
  $region30: #{masked_mha_forward.2} parent=0
    _
  %s6 = ssub.s32 1, %s4
  %s7 = scalar_select 0, %s6, %s4
  // Predicated region
  $region2: #{masked_mha_forward.2} parent=0 // pred_check
    _
  $region3: #{masked_mha_forward.2} parent=0 // pred_check_branch
    %9 = sbr.rel (0) target = $region5
  $region4: #{masked_mha_forward.2} parent=0 // pred_region
    _
  $region5: #{masked_mha_forward.2} parent=0 // pred_fallthru
    _
  // Predicated region
  $region6: #{masked_mha_forward.2} parent=0 // pred_check
    _
  $region7: #{masked_mha_forward.2} parent=0 // pred_check_branch
    %11 = sbr.rel (0) target = $region9
  $region8: #{masked_mha_forward.2} parent=0 // pred_region
    _
  $region9: #{masked_mha_forward.2} parent=0 // pred_fallthru
    _
  // Predicated region
  $region10: #{masked_mha_forward.2} parent=0 // pred_check
    _
  $region11: #{masked_mha_forward.2} parent=0 // pred_check_branch
    %13 = sbr.rel (0) target = $region13
  $region12: #{masked_mha_forward.2} parent=0 // pred_region
    _
  $region13: #{masked_mha_forward.2} parent=0 // pred_fallthru
    _
  %p15 = scmp.eq.s32.totalorder 0, 0
  // Predicated region
  $region14: #{masked_mha_forward.2} parent=0 // pred_check
    %p16 = pneg %p15
  $region15: #{masked_mha_forward.2} parent=0 // pred_check_branch
    %18 = sbr.rel (%p16) target = $region17
  $region16: #{masked_mha_forward.2} parent=0 // pred_region
    %vm19 = vcmask 523264
    %20 = vst.msk [vmem:[#allocation2] sm:$0xff] %vm19, 0.0
    %21 = vst.msk [vmem:[#allocation2 + $0x8] sm:$0xff] %vm19, 0.0
  $region17: #{masked_mha_forward.2} parent=0 // pred_fallthru
    _
  %v22 = vld [vmem:[#allocation2] sm:$0xff]
  %v23 = vld [vmem:[#allocation2 + $0x8] sm:$0xff]
  %v24 = vld [vmem:[%s0] sm:$0xf]
  %v25 = vld [vmem:[%s0 + $0x4] sm:$0xf]
  %v26 = vld [vmem:[%s1] sm:$0xf]
  %v27 = vld [vmem:[%s1 + $0x4] sm:$0xf]
  %v28 = vld [vmem:[%s1 + $0x8] sm:$0xf]
  %v29 = vld [vmem:[%s1 + $0xc] sm:$0xf]
  %v32 = vunpack.c.l.b16 %v24
  %v33 = vunpack.c.l.b16 %v25
  %v34 = vpack.c.b16 %v33, %v32
  %v39 = vunpack.c.l.b16 %v26
  %v40 = vunpack.c.l.b16 %v27
  %v41 = vunpack.c.l.b16 %v28
  %v42 = vunpack.c.l.b16 %v29
  %v43 = vpack.c.b16 %v40, %v39
  %v44 = vpack.c.b16 %v42, %v41
  %vm47 = vcmask 261120
  %v49 = vsel %vm47, %v34, 0
  %51 = vmatprep.subr.bf16.mxu0 0
  %52 = vmatpush1.bf16.msra.mxu0 0
  %53 = vmatprep.subr.bf16.mxu0 0
  %54 = vmatpush1.bf16.msra.mxu0 0
  %55 = vmatprep.subr.bf16.mxu0 0
  %56 = vmatpush1.bf16.msra.mxu0 0
  %57 = vmatprep.subr.bf16.mxu0 0
  %58 = vmatpush1.bf16.msra.mxu0 0
  %59 = vmatprep.subr.bf16.mxu0 0
  %60 = vmatpush1.bf16.msra.mxu0 0
  %61 = vmatprep.subr.bf16.mxu0 0
  %62 = vmatpush1.bf16.msra.mxu0 0
  %63 = vmatprep.subr.bf16.mxu0 0
  %64 = vmatpush1.bf16.msra.mxu0 %v44
  %65 = vmatprep.subr.bf16.mxu0 0
  %66 = vmatpush1.bf16.msra.mxu0 %v43
  %67 = vmatprep.subr.bf16.mxu0 0
  %68 = vmatpush2.bf16.msra.mxu0 0
  %69 = vmatprep.subr.bf16.mxu0 0
  %70 = vmatpush2.bf16.msra.mxu0 0
  %71 = vmatprep.subr.bf16.mxu0 0
  %72 = vmatpush2.bf16.msra.mxu0 0
  %73 = vmatprep.subr.bf16.mxu0 0
  %74 = vmatpush2.bf16.msra.mxu0 0
  %75 = vmatprep.subr.bf16.mxu0 0
  %76 = vmatpush2.bf16.msra.mxu0 0
  %77 = vmatprep.subr.bf16.mxu0 0
  %78 = vmatpush2.bf16.msra.mxu0 0
  %79 = vmatprep.subr.bf16.mxu0 0
  %80 = vmatpush2.bf16.msra.mxu0 0
  %81 = vmatprep.subr.bf16.mxu0 0
  %82 = vmatpush2.bf16.msra.mxu0 0
  %83 = vmatprep.mubr.bf16.mxu0 0
  %84 = vmatmul.mubr.bf16.gmra.mxu0 %v49
  %v85 = vpop.f32.mrf.mxu0
  %v86 = vadd.f32 0.0, %v85
  %v87 = vpop.f32.mrf.mxu0
  %v88 = vpop.f32.mrf.mxu0
  %v89 = vadd.f32 0.0, %v88
  %v90 = vpop.f32.mrf.mxu0
  %91 = vdwg.mxu0
  %v92 = vadd.f32 %v22, %v86
  %v93 = vadd.f32 %v23, %v89
  %vm94 = vcmask 523264
  %95 = vst.msk [vmem:[#allocation2] sm:$0xff] %vm94, %v92
  %96 = vst.msk [vmem:[#allocation2 + $0x8] sm:$0xff] %vm94, %v93
  // Predicated region
  $region18: #{masked_mha_forward.2} parent=0 // pred_check
    %p97 = pneg %p15
  $region19: #{masked_mha_forward.2} parent=0 // pred_check_branch
    %99 = sbr.rel (%p97) target = $region21
  $region20: #{masked_mha_forward.2} parent=0 // pred_region
    %v100 = vld [vmem:[#allocation2] sm:$0xff]
    %v101 = vld [vmem:[#allocation2 + $0x8] sm:$0xff]
    %v102 = vld [vmem:[%s2] sm:$0x1]
    %v104 = vlaneseq
    %v105 = vshrl.u32 %v104, 7
    %v106 = vsub.s32 0, %v105
    %v107 = vrot.slane %v102, %v106
    %v109 = vadd.f32 %v100, %v107
    %v110 = vadd.f32 %v101, %v107
    %111 = vst.msk [vmem:[%s3] sm:$0xff] %vm94, %v109
    %112 = vst.msk [vmem:[%s3 + $0x8] sm:$0xff] %vm94, %v110
  $region21: #{masked_mha_forward.2} parent=0 // pred_fallthru
    _
  // Predicated region
  $region22: #{masked_mha_forward.2} parent=0 // pred_check
    _
  $region23: #{masked_mha_forward.2} parent=0 // pred_check_branch
    %114 = sbr.rel (0) target = $region25
  $region24: #{masked_mha_forward.2} parent=0 // pred_region
    _
  $region25: #{masked_mha_forward.2} parent=0 // pred_fallthru
    _
  // Predicated region
  $region26: #{masked_mha_forward.2} parent=0 // pred_check
    _
  $region27: #{masked_mha_forward.2} parent=0 // pred_check_branch
    %116 = sbr.rel (0) target = $region29
  $region28: #{masked_mha_forward.2} parent=0 // pred_region
    _
  $region29: #{masked_mha_forward.2} parent=0 // pred_fallthru
    _

// kernel: masked_mha_forward.3
$region0: #{masked_mha_forward.3}
  #allocation0 [shape = 'u32[]', space=smem, size = 0x4, offset = 0x4, fixed_abs, tag = 'smem constant byte address 0x4 - core index']
  #allocation1 [shape = 'u32[144,128]{1,0:T(1,128)}', space=vmem, size = 0x12000, scoped, tag = 'internal scratch']
  #allocation2 [shape = 'f32[16,1]{1,0:T(8,128)}', space=vmem, size = 0x2000, scoped, tag = 'scratch operand']
  #allocation3 [shape = 'f32[16,1]{1,0:T(8,128)}', space=vmem, size = 0x2000, scoped, tag = 'scratch operand']
  %s0 = inlined_call_operand.vmem [shape: bf16[2,2,2,8,8], index: 0, kind: input, shape index: {}]
  %s1 = inlined_call_operand.vmem [shape: bf16[2,2,16,8], index: 1, kind: input, shape index: {}]
  %s2 = inlined_call_operand.vmem [shape: bf16[2,2,16,8], index: 2, kind: input, shape index: {}]
  %s3 = inlined_call_operand.vmem [shape: bf16[2,1,8,16], index: 3, kind: input, shape index: {}]
  %s4 = inlined_call_operand.hbm [shape: f32[2,2,2,8,8], index: 4, kind: output, shape index: {}]
  %s5 = sld [smem:[#allocation0]]
  $region57: #{masked_mha_forward.3} parent=0
    _
  %s7 = ssub.s32 1, %s5
  %s8 = scalar_select 0, %s7, %s5
  $region1: #{masked_mha_forward.3} parent=0
    #allocation4 [shape = 'u8[16384]{0}', space=vmem, size = 0x4000, scoped, tag = 'output window, operand 0']
    #allocation5 [shape = 's32[2]{0}', space=sflag, size = 0x8, scoped, tag = 'scoped memory for masked_mha_forward.3']
    %9 = vsyncpa [#allocation5], 0
    %s10 = scalar_lea.sflag [#allocation5], 1
    %11 = vsyncpa %s10, 0
    loop: start=0, step=1, limit=6
    $region2: #{masked_mha_forward.3} parent=1 // loop_pre_header
      _
    $region3: #{masked_mha_forward.3} parent=1 // loop_header
      %s13 = sphi 0, %s17
      %p14 = scmp.ge.s32.totalorder %s13, 6
      %s20 = sphi 0, %s46
      %s21 = sphi 0, %s42
      %s22 = sphi 0, %s38
      %s23 = sphi 0, %s34
      %s24 = sphi 0, %s20
      %s25 = sphi 0, %s21
      %s26 = sphi 0, %s22
      %s27 = sphi 0, %s23
      %s28 = sphi 0, %s24
      %s29 = sphi 0, %s25
      %s30 = sphi 0, %s26
      %s31 = sphi 0, %s27
      %s53 = sphi 0, %s55
      %s56 = sphi 0, %s53
      %s57 = sphi 0, %s56
      %s73 = sphi 0, %s57
      %s83 = sphi 0, %s85
      %s86 = sphi 0, %s83
      %s87 = sphi 0, %s86
      %s103 = sphi 0, %s87
      %s113 = sphi 0, %s115
      %s116 = sphi 0, %s113
      %s117 = sphi 0, %s116
      %s133 = sphi 0, %s117
      %s143 = sphi 0, %s145
      %s146 = sphi 0, %s143
      %s147 = sphi 0, %s146
      %s163 = sphi 0, %s147
      %s173 = sphi 0, %s175
      %s176 = sphi 0, %s173
      %s177 = sphi 0, %s176
      %s193 = sphi 0, %s177
    $region4: #{masked_mha_forward.3} parent=1 // loop_header_branch
      %16 = sbr.rel (%p14) target = $region8
    $region5: #{masked_mha_forward.3} parent=1 // loop_body
      %s18 = ssub.s32 %s13, 1
      %s19 = ssub.s32 %s13, 2
      %s32 = sadd.s32 1, %s23
      %p33 = scmp.ge.s32.totalorder %s32, 1
      %s34 = scalar_select %p33, 0, %s32
      %s35 = sadd.s32 1, %s22
      %s36 = scalar_select %p33, %s35, %s22
      %p37 = scmp.ge.s32.totalorder %s36, 1
      %s38 = scalar_select %p37, 0, %s36
      %s39 = sadd.s32 1, %s21
      %s40 = scalar_select %p37, %s39, %s21
      %p41 = scmp.ge.s32.totalorder %s40, 2
      %s42 = scalar_select %p41, 0, %s40
      %s43 = sadd.s32 1, %s20
      %s44 = scalar_select %p41, %s43, %s20
      %p45 = scmp.ge.s32.totalorder %s44, 2
      %s46 = scalar_select %p45, 0, %s44
      %s47 = ssub.s32 %s20, %s46
      %s48 = ssub.s32 %s21, %s42
      %s49 = sor.u32 %s47, %s48
      %s50 = ssub.s32 %s22, %s38
      %s51 = sor.u32 %s49, %s50
      %p52 = scmp.eq.s32.totalorder %s51, 0
      %s54 = sadd.s32 %s53, 1
      %s55 = scalar_select %p52, %s53, %s54
      %p58 = pneg %p52
      %p59 = scmp.eq.s32.totalorder %s13, 3
      %p60 = por %p58, %p59
      %p61 = scmp.ne.s32.totalorder %s53, %s56
      %p62 = scmp.eq.s32.totalorder %s13, 0
      %p63 = por %p61, %p62
      %p64 = scmp.ne.s32.totalorder %s53, %s56
      %p65 = scmp.eq.s32.totalorder %s18, 3
      %p66 = por %p64, %p65
      %p67 = scmp.ne.s32.totalorder %s56, %s57
      %p68 = scmp.eq.s32.totalorder %s18, 0
      %p69 = por %p67, %p68
      %p70 = scmp.ne.s32.totalorder %s56, %s57
      %p71 = scmp.eq.s32.totalorder %s19, 3
      %p72 = por %p70, %p71
      %p74 = scmp.ne.s32.totalorder %s57, %s73
      %p75 = scmp.eq.s32.totalorder %s19, 0
      %p76 = por %p74, %p75
      %s77 = ssub.s32 %s20, %s46
      %s78 = ssub.s32 %s21, %s42
      %s79 = sor.u32 %s77, %s78
      %s80 = ssub.s32 %s23, %s34
      %s81 = sor.u32 %s79, %s80
      %p82 = scmp.eq.s32.totalorder %s81, 0
      %s84 = sadd.s32 %s83, 1
      %s85 = scalar_select %p82, %s83, %s84
      %p88 = pneg %p82
      %p89 = scmp.eq.s32.totalorder %s13, 3
      %p90 = por %p88, %p89
      %p91 = scmp.ne.s32.totalorder %s83, %s86
      %p92 = scmp.eq.s32.totalorder %s13, 0
      %p93 = por %p91, %p92
      %p94 = scmp.ne.s32.totalorder %s83, %s86
      %p95 = scmp.eq.s32.totalorder %s18, 3
      %p96 = por %p94, %p95
      %p97 = scmp.ne.s32.totalorder %s86, %s87
      %p98 = scmp.eq.s32.totalorder %s18, 0
      %p99 = por %p97, %p98
      %p100 = scmp.ne.s32.totalorder %s86, %s87
      %p101 = scmp.eq.s32.totalorder %s19, 3
      %p102 = por %p100, %p101
      %p104 = scmp.ne.s32.totalorder %s87, %s103
      %p105 = scmp.eq.s32.totalorder %s19, 0
      %p106 = por %p104, %p105
      %s107 = ssub.s32 %s20, %s46
      %s108 = ssub.s32 %s21, %s42
      %s109 = sor.u32 %s107, %s108
      %s110 = ssub.s32 %s23, %s34
      %s111 = sor.u32 %s109, %s110
      %p112 = scmp.eq.s32.totalorder %s111, 0
      %s114 = sadd.s32 %s113, 1
      %s115 = scalar_select %p112, %s113, %s114
      %p118 = pneg %p112
      %p119 = scmp.eq.s32.totalorder %s13, 3
      %p120 = por %p118, %p119
      %p121 = scmp.ne.s32.totalorder %s113, %s116
      %p122 = scmp.eq.s32.totalorder %s13, 0
      %p123 = por %p121, %p122
      %p124 = scmp.ne.s32.totalorder %s113, %s116
      %p125 = scmp.eq.s32.totalorder %s18, 3
      %p126 = por %p124, %p125
      %p127 = scmp.ne.s32.totalorder %s116, %s117
      %p128 = scmp.eq.s32.totalorder %s18, 0
      %p129 = por %p127, %p128
      %p130 = scmp.ne.s32.totalorder %s116, %s117
      %p131 = scmp.eq.s32.totalorder %s19, 3
      %p132 = por %p130, %p131
      %p134 = scmp.ne.s32.totalorder %s117, %s133
      %p135 = scmp.eq.s32.totalorder %s19, 0
      %p136 = por %p134, %p135
      %s137 = ssub.s32 %s20, %s46
      %s138 = ssub.s32 %s22, %s38
      %s139 = sor.u32 %s137, %s138
      %s140 = ssub.s32 %s23, %s34
      %s141 = sor.u32 %s139, %s140
      %p142 = scmp.eq.s32.totalorder %s141, 0
      %s144 = sadd.s32 %s143, 1
      %s145 = scalar_select %p142, %s143, %s144
      %p148 = pneg %p142
      %p149 = scmp.eq.s32.totalorder %s13, 3
      %p150 = por %p148, %p149
      %p151 = scmp.ne.s32.totalorder %s143, %s146
      %p152 = scmp.eq.s32.totalorder %s13, 0
      %p153 = por %p151, %p152
      %p154 = scmp.ne.s32.totalorder %s143, %s146
      %p155 = scmp.eq.s32.totalorder %s18, 3
      %p156 = por %p154, %p155
      %p157 = scmp.ne.s32.totalorder %s146, %s147
      %p158 = scmp.eq.s32.totalorder %s18, 0
      %p159 = por %p157, %p158
      %p160 = scmp.ne.s32.totalorder %s146, %s147
      %p161 = scmp.eq.s32.totalorder %s19, 3
      %p162 = por %p160, %p161
      %p164 = scmp.ne.s32.totalorder %s147, %s163
      %p165 = scmp.eq.s32.totalorder %s19, 0
      %p166 = por %p164, %p165
      %s167 = ssub.s32 %s20, %s46
      %s168 = ssub.s32 %s21, %s42
      %s169 = sor.u32 %s167, %s168
      %s170 = ssub.s32 %s22, %s38
      %s171 = sor.u32 %s169, %s170
      %p172 = scmp.eq.s32.totalorder %s171, 0
      %s174 = sadd.s32 %s173, 1
      %s175 = scalar_select %p172, %s173, %s174
      %p178 = pneg %p172
      %p179 = scmp.eq.s32.totalorder %s13, 3
      %p180 = por %p178, %p179
      %p181 = scmp.ne.s32.totalorder %s173, %s176
      %p182 = scmp.eq.s32.totalorder %s13, 0
      %p183 = por %p181, %p182
      %p184 = scmp.ne.s32.totalorder %s173, %s176
      %p185 = scmp.eq.s32.totalorder %s18, 3
      %p186 = por %p184, %p185
      %p187 = scmp.ne.s32.totalorder %s176, %s177
      %p188 = scmp.eq.s32.totalorder %s18, 0
      %p189 = por %p187, %p188
      %p190 = scmp.ne.s32.totalorder %s176, %s177
      %p191 = scmp.eq.s32.totalorder %s19, 3
      %p192 = por %p190, %p191
      %p194 = scmp.ne.s32.totalorder %s177, %s193
      %p195 = scmp.eq.s32.totalorder %s19, 0
      %p196 = por %p194, %p195
      %p197 = scmp.le.s32.totalorder 1, %s13
      %p198 = scmp.lt.s32.totalorder %s13, 5
      %p199 = pnand %p197, %p198
      %p200 = pneg %p199
      // Predicated region
      $region9: #{masked_mha_forward.3} parent=5 // pred_check
        _
      $region10: #{masked_mha_forward.3} parent=5 // pred_check_branch
        %202 = sbr.rel (%p199) target = $region12
      $region11: #{masked_mha_forward.3} parent=5 // pred_region
        %s203 = ssub.s32 %s13, 1
      $region12: #{masked_mha_forward.3} parent=5 // pred_fallthru
        _
      %p204 = scmp.lt.s32.totalorder %s13, 4
      // Predicated region
      $region13: #{masked_mha_forward.3} parent=5 // pred_check
        %p205 = pneg %p204
      $region14: #{masked_mha_forward.3} parent=5 // pred_check_branch
        %207 = sbr.rel (%p205) target = $region16
      $region15: #{masked_mha_forward.3} parent=5 // pred_region
        // Predicated region
        $region17: #{masked_mha_forward.3} parent=15 // pred_check
          %p208 = pneg %p63
        $region18: #{masked_mha_forward.3} parent=15 // pred_check_branch
          %210 = sbr.rel (%p208) target = $region20
        $region19: #{masked_mha_forward.3} parent=15 // pred_region
          %p211 = scmp.lt.s32.totalorder %s20, 1
          %s212 = scalar_select %p211, %s20, 1
          %p213 = scmp.lt.s32.totalorder %s21, 1
          %s214 = scalar_select %p213, %s21, 1
          %p215 = scmp.lt.s32.totalorder %s22, 0
          %s216 = scalar_select %p215, %s22, 0
          %s217 = smul.addr %s214, 2
          %s218 = sadd.s32 %s216, %s217
          %s219 = smul.addr %s212, 4
          %s220 = sadd.s32 %s218, %s219
          %s221 = smul.addr %s220, 4
          %s222 = scalar_lea.vmem %s0, %s221
        $region20: #{masked_mha_forward.3} parent=15 // pred_fallthru
          _
        // Predicated region
        $region21: #{masked_mha_forward.3} parent=15 // pred_check
          %p223 = pneg %p93
        $region22: #{masked_mha_forward.3} parent=15 // pred_check_branch
          %225 = sbr.rel (%p223) target = $region24
        $region23: #{masked_mha_forward.3} parent=15 // pred_region
          %s226 = smul.u32 2, %s23
          %p227 = scmp.lt.s32.totalorder %s20, 1
          %s228 = scalar_select %p227, %s20, 1
          %p229 = scmp.lt.s32.totalorder %s21, 1
          %s230 = scalar_select %p229, %s21, 1
          %p231 = scmp.lt.s32.totalorder %s226, 1
          %s232 = scalar_select %p231, %s226, 1
          %s233 = smul.addr %s230, 2
          %s234 = sadd.s32 %s232, %s233
          %s235 = smul.addr %s228, 4
          %s236 = sadd.s32 %s234, %s235
          %s237 = smul.addr %s236, 4
          %s238 = scalar_lea.vmem %s1, %s237
          %s239 = smul.u32 2, %s23
        $region24: #{masked_mha_forward.3} parent=15 // pred_fallthru
          _
        // Predicated region
        $region25: #{masked_mha_forward.3} parent=15 // pred_check
          %p240 = pneg %p123
        $region26: #{masked_mha_forward.3} parent=15 // pred_check_branch
          %242 = sbr.rel (%p240) target = $region28
        $region27: #{masked_mha_forward.3} parent=15 // pred_region
          %s243 = smul.u32 2, %s23
          %p244 = scmp.lt.s32.totalorder %s20, 1
          %s245 = scalar_select %p244, %s20, 1
          %p246 = scmp.lt.s32.totalorder %s21, 1
          %s247 = scalar_select %p246, %s21, 1
          %p248 = scmp.lt.s32.totalorder %s243, 1
          %s249 = scalar_select %p248, %s243, 1
          %s250 = smul.addr %s247, 2
          %s251 = sadd.s32 %s249, %s250
          %s252 = smul.addr %s245, 4
          %s253 = sadd.s32 %s251, %s252
          %s254 = smul.addr %s253, 4
          %s255 = scalar_lea.vmem %s2, %s254
          %s256 = smul.u32 2, %s23
        $region28: #{masked_mha_forward.3} parent=15 // pred_fallthru
          _
        // Predicated region
        $region29: #{masked_mha_forward.3} parent=15 // pred_check
          %p257 = pneg %p153
        $region30: #{masked_mha_forward.3} parent=15 // pred_check_branch
          %259 = sbr.rel (%p257) target = $region32
        $region31: #{masked_mha_forward.3} parent=15 // pred_region
          %p260 = scmp.lt.s32.totalorder %s20, 1
          %s261 = scalar_select %p260, %s20, 1
          %p262 = scmp.lt.s32.totalorder %s22, 0
          %s263 = scalar_select %p262, %s22, 0
          %p264 = scmp.lt.s32.totalorder %s23, 0
          %s265 = scalar_select %p264, %s23, 0
          %s266 = sadd.s32 %s265, %s263
          %s267 = sadd.s32 %s266, %s261
          %s268 = smul.addr %s267, 4
          %s269 = scalar_lea.vmem %s3, %s268
        $region32: #{masked_mha_forward.3} parent=15 // pred_fallthru
          _
      $region16: #{masked_mha_forward.3} parent=5 // pred_fallthru
        _
      %p270 = scmp.le.s32.totalorder 1, %s13
      %p271 = scmp.lt.s32.totalorder %s13, 5
      %p272 = pnand %p270, %p271
      %p273 = pneg %p272
      // Predicated region
      $region33: #{masked_mha_forward.3} parent=5 // pred_check
        _
      $region34: #{masked_mha_forward.3} parent=5 // pred_check_branch
        %275 = sbr.rel (%p272) target = $region36
      $region35: #{masked_mha_forward.3} parent=5 // pred_region
        %s276 = ssub.s32 %s13, 1
        %p277 = scmp.lt.s32.totalorder %s24, 1
        %s278 = scalar_select %p277, %s24, 1
        %p279 = scmp.lt.s32.totalorder %s25, 1
        %s280 = scalar_select %p279, %s25, 1
        %p281 = scmp.lt.s32.totalorder %s26, 0
        %s282 = scalar_select %p281, %s26, 0
        %s283 = smul.addr %s280, 2
        %s284 = sadd.s32 %s282, %s283
        %s285 = smul.addr %s278, 4
        %s286 = sadd.s32 %s284, %s285
        %s287 = smul.addr %s286, 4
        %s288 = scalar_lea.vmem %s0, %s287
        %p289 = pneg %p69
        %p290 = pneg %p66
        %s291 = smul.u32 2, %s27
        %p292 = scmp.lt.s32.totalorder %s24, 1
        %s293 = scalar_select %p292, %s24, 1
        %p294 = scmp.lt.s32.totalorder %s25, 1
        %s295 = scalar_select %p294, %s25, 1
        %p296 = scmp.lt.s32.totalorder %s291, 1
        %s297 = scalar_select %p296, %s291, 1
        %s298 = smul.addr %s295, 2
        %s299 = sadd.s32 %s297, %s298
        %s300 = smul.addr %s293, 4
        %s301 = sadd.s32 %s299, %s300
        %s302 = smul.addr %s301, 4
        %s303 = scalar_lea.vmem %s1, %s302
        %p304 = pneg %p99
        %p305 = pneg %p96
        %s306 = smul.u32 2, %s27
        %p307 = scmp.lt.s32.totalorder %s24, 1
        %s308 = scalar_select %p307, %s24, 1
        %p309 = scmp.lt.s32.totalorder %s25, 1
        %s310 = scalar_select %p309, %s25, 1
        %p311 = scmp.lt.s32.totalorder %s306, 1
        %s312 = scalar_select %p311, %s306, 1
        %s313 = smul.addr %s310, 2
        %s314 = sadd.s32 %s312, %s313
        %s315 = smul.addr %s308, 4
        %s316 = sadd.s32 %s314, %s315
        %s317 = smul.addr %s316, 4
        %s318 = scalar_lea.vmem %s2, %s317
        %p319 = pneg %p129
        %p320 = pneg %p126
        %p321 = scmp.lt.s32.totalorder %s24, 1
        %s322 = scalar_select %p321, %s24, 1
        %p323 = scmp.lt.s32.totalorder %s26, 0
        %s324 = scalar_select %p323, %s26, 0
        %p325 = scmp.lt.s32.totalorder %s27, 0
        %s326 = scalar_select %p325, %s27, 0
        %s327 = sadd.s32 %s326, %s324
        %s328 = sadd.s32 %s327, %s322
        %s329 = smul.addr %s328, 4
        %s330 = scalar_lea.vmem %s3, %s329
        %p331 = pneg %p159
        %p332 = pneg %p156
        %p333 = pneg %p189
        %p334 = pneg %p186
        %s335 = sand.u32 %s176, 1
        %s336 = scalar_lea.sflag [#allocation5], %s335
        %s337 = sand.u32 %s176, 1
        %s338 = smul.addr %s337, 16
        %s339 = scalar_lea.vmem [#allocation4], %s338
        %p340 = scmp.lt.s32.totalorder %s24, 1
        %s341 = scalar_select %p340, %s24, 1
        %p342 = scmp.lt.s32.totalorder %s25, 1
        %s343 = scalar_select %p342, %s25, 1
        %p344 = scmp.lt.s32.totalorder %s26, 0
        %s345 = scalar_select %p344, %s26, 0
        %s346 = smul.addr %s343, 2
        %s347 = sadd.s32 %s345, %s346
        %s348 = smul.addr %s341, 4
        %s349 = sadd.s32 %s347, %s348
        %s350 = smul.addr %s349, 4
        %s351 = scalar_lea.vmem %s0, %s350
        %s352 = smul.u32 2, %s27
        %p353 = scmp.lt.s32.totalorder %s24, 1
        %s354 = scalar_select %p353, %s24, 1
        %p355 = scmp.lt.s32.totalorder %s25, 1
        %s356 = scalar_select %p355, %s25, 1
        %p357 = scmp.lt.s32.totalorder %s352, 1
        %s358 = scalar_select %p357, %s352, 1
        %s359 = smul.addr %s356, 2
        %s360 = sadd.s32 %s358, %s359
        %s361 = smul.addr %s354, 4
        %s362 = sadd.s32 %s360, %s361
        %s363 = smul.addr %s362, 4
        %s364 = scalar_lea.vmem %s1, %s363
        %s365 = smul.u32 2, %s27
        %s366 = smul.u32 2, %s27
        %p367 = scmp.lt.s32.totalorder %s24, 1
        %s368 = scalar_select %p367, %s24, 1
        %p369 = scmp.lt.s32.totalorder %s25, 1
        %s370 = scalar_select %p369, %s25, 1
        %p371 = scmp.lt.s32.totalorder %s366, 1
        %s372 = scalar_select %p371, %s366, 1
        %s373 = smul.addr %s370, 2
        %s374 = sadd.s32 %s372, %s373
        %s375 = smul.addr %s368, 4
        %s376 = sadd.s32 %s374, %s375
        %s377 = smul.addr %s376, 4
        %s378 = scalar_lea.vmem %s2, %s377
        %s379 = smul.u32 2, %s27
        %p380 = scmp.lt.s32.totalorder %s24, 1
        %s381 = scalar_select %p380, %s24, 1
        %p382 = scmp.lt.s32.totalorder %s26, 0
        %s383 = scalar_select %p382, %s26, 0
        %p384 = scmp.lt.s32.totalorder %s27, 0
        %s385 = scalar_select %p384, %s27, 0
        %s386 = sadd.s32 %s385, %s383
        %s387 = sadd.s32 %s386, %s381
        %s388 = smul.addr %s387, 4
        %s389 = scalar_lea.vmem %s3, %s388
        %p391 = scmp.eq.s32.totalorder %s27, 0
        // Predicated region
        $region37: #{masked_mha_forward.3} parent=35 // pred_check
          %p392 = pneg %p391
        $region38: #{masked_mha_forward.3} parent=35 // pred_check_branch
          %394 = sbr.rel (%p392) target = $region40
        $region39: #{masked_mha_forward.3} parent=35 // pred_region
          %vm395 = vcmask 7168
          %396 = vst.msk [vmem:[#allocation2] sm:$0xff] %vm395, -inf
          %397 = vst.msk [vmem:[#allocation2 + $0x8] sm:$0xff] %vm395, -inf
          %398 = vst.msk [vmem:[#allocation3] sm:$0xff] %vm395, 0.0
          %399 = vst.msk [vmem:[#allocation3 + $0x8] sm:$0xff] %vm395, 0.0
          %vm400 = vcmask 64512
          %401 = vst.msk [vmem:[%s339] sm:$0xff] %vm400, 0.0
          %402 = vst.msk [vmem:[%s339 + $0x8] sm:$0xff] %vm400, 0.0
        $region40: #{masked_mha_forward.3} parent=35 // pred_fallthru
          _
        %v403 = vld [vmem:[%s351] sm:$0xf]
        %v404 = vld [vmem:[%s351 + $0x4] sm:$0xf]
        %v405 = vld [vmem:[%s364] sm:$0xf]
        %v406 = vld [vmem:[%s364 + $0x4] sm:$0xf]
        %v407 = vld [vmem:[%s378] sm:$0xf]
        %v408 = vld [vmem:[%s378 + $0x4] sm:$0xf]
        %v411 = vunpack.c.l.b16 %v403
        %v412 = vunpack.c.l.b16 %v404
        %v413 = vpack.c.b16 %v412, %v411
        %v416 = vunpack.c.l.b16 %v405
        %v417 = vunpack.c.l.b16 %v406
        %v418 = vpack.c.b16 %v417, %v416
        %vm419 = vcmask 64512
        %v421 = vsel %vm419, %v413, 0
        %v424 = vsel %vm419, %v418, 0
        %426 = vmatprep.subr.bf16.mxu0 0
        %427 = vmatpush1.bf16.xpose.msra.mxu0 0
        %428 = vmatprep.subr.bf16.mxu0 0
        %429 = vmatpush1.bf16.xpose.msra.mxu0 0
        %430 = vmatprep.subr.bf16.mxu0 0
        %431 = vmatpush1.bf16.xpose.msra.mxu0 0
        %432 = vmatprep.subr.bf16.mxu0 0
        %433 = vmatpush1.bf16.xpose.msra.mxu0 0
        %434 = vmatprep.subr.bf16.mxu0 0
        %435 = vmatpush1.bf16.xpose.msra.mxu0 0
        %436 = vmatprep.subr.bf16.mxu0 0
        %437 = vmatpush1.bf16.xpose.msra.mxu0 0
        %438 = vmatprep.subr.bf16.mxu0 0
        %439 = vmatpush1.bf16.xpose.msra.mxu0 0
        %440 = vmatprep.subr.bf16.mxu0 0
        %441 = vmatpush1.bf16.xpose.msra.mxu0 %v424
        %442 = vmatprep.subr.bf16.mxu0 0
        %443 = vmatpush2.bf16.xpose.msra.mxu0 0
        %444 = vmatprep.subr.bf16.mxu0 0
        %445 = vmatpush2.bf16.xpose.msra.mxu0 0
        %446 = vmatprep.subr.bf16.mxu0 0
        %447 = vmatpush2.bf16.xpose.msra.mxu0 0
        %448 = vmatprep.subr.bf16.mxu0 0
        %449 = vmatpush2.bf16.xpose.msra.mxu0 0
        %450 = vmatprep.subr.bf16.mxu0 0
        %451 = vmatpush2.bf16.xpose.msra.mxu0 0
        %452 = vmatprep.subr.bf16.mxu0 0
        %453 = vmatpush2.bf16.xpose.msra.mxu0 0
        %454 = vmatprep.subr.bf16.mxu0 0
        %455 = vmatpush2.bf16.xpose.msra.mxu0 0
        %456 = vmatprep.subr.bf16.mxu0 0
        %457 = vmatpush2.bf16.xpose.msra.mxu0 0
        %458 = vmatprep.mubr.bf16.mxu0 0
        %459 = vmatmul.mubr.bf16.gmra.mxu0 %v421
        %v460 = vpop.f32.mrf.mxu0
        %v461 = vadd.f32 0.0, %v460
        %v462 = vpop.f32.mrf.mxu0
        %v463 = vpop.f32.mrf.mxu0
        %v464 = vadd.f32 0.0, %v463
        %v465 = vpop.f32.mrf.mxu0
        %466 = vdwg.mxu0
        %v467 = vmul.f32 %v461, 0.35355338
        %v468 = vmul.f32 %v464, 0.35355338
        %v469 = vld [vmem:[%s389] sm:$0xf]
        %v470 = vunpack.c.l.bf16 %v469
        %v471 = vadd.f32 %v467, %v470
        %v472 = vadd.f32 %v468, %v470
        %vm473 = vcmask 130048
        %v474 = vsel %vm473, %v471, -inf
        %475 = vmax.xlane.f32.xlu0 %v474
        %v476 = vpop.xlane.xlu0 %475
        %v477 = vsel %vm473, %v472, -inf
        %478 = vmax.xlane.f32.xlu0 %v477
        %v479 = vpop.xlane.xlu0 %478
        %v480 = vld [vmem:[#allocation2] sm:$0xff]
        %v481 = vld [vmem:[#allocation2 + $0x8] sm:$0xff]
        %v482 = vmax.f32 %v480, %v476
        %v483 = vmax.f32 %v481, %v479
        %v484 = vsub.f32 %v480, %v482
        %v485 = vsub.f32 %v481, %v483
        %v486 = vmul.f32 %v484, 1.442695
        %v487 = vpow.pop %v486
        %v488 = vmul.f32 %v485, 1.442695
        %v489 = vpow.pop %v488
        %491 = vset.pattern.permute.xlu0 0
        %492 = vperm.xlu0 %491, %v482
        %v493 = vpop.permute.xlu0 %492
        %496 = vset.pattern.permute.xlu0 0
        %497 = vperm.xlu0 %496, %v483
        %v498 = vpop.permute.xlu0 %497
        %v500 = vsub.f32 %v471, %v493
        %v501 = vsub.f32 %v472, %v498
        %v502 = vmul.f32 %v500, 1.442695
        %v503 = vpow.pop %v502
        %v504 = vmul.f32 %v501, 1.442695
        %v505 = vpow.pop %v504
        %v506 = vld [vmem:[#allocation3] sm:$0xff]
        %v507 = vld [vmem:[#allocation3 + $0x8] sm:$0xff]
        %v508 = vmul.f32 %v487, %v506
        %v509 = vmul.f32 %v489, %v507
        %v510 = vsel %vm473, %v503, 0.0
        %511 = vadd.xlane.f32.xlu0 %v510
        %v512 = vpop.xlane.xlu0 %511
        %v513 = vsel %vm473, %v505, 0.0
        %514 = vadd.xlane.f32.xlu0 %v513
        %v515 = vpop.xlane.xlu0 %514
        %v516 = vadd.f32 %v508, %v512
        %v517 = vadd.f32 %v509, %v515
        %vm518 = vcmask 7168
        %519 = vst.msk [vmem:[#allocation3] sm:$0xff] %vm518, %v516
        %520 = vst.msk [vmem:[#allocation3 + $0x8] sm:$0xff] %vm518, %v517
        %v521 = vpack.c.bf16 %v505, %v503
        %v524 = vunpack.c.l.b16 %v407
        %v525 = vunpack.c.l.b16 %v408
        %v526 = vpack.c.b16 %v525, %v524
        %v529 = vsel %vm473, %v521, 0
        %531 = vmatprep.subr.bf16.mxu0 0
        %532 = vmatpush1.bf16.msra.mxu0 0
        %533 = vmatprep.subr.bf16.mxu0 0
        %534 = vmatpush1.bf16.msra.mxu0 0
        %535 = vmatprep.subr.bf16.mxu0 0
        %536 = vmatpush1.bf16.msra.mxu0 0
        %537 = vmatprep.subr.bf16.mxu0 0
        %538 = vmatpush1.bf16.msra.mxu0 0
        %539 = vmatprep.subr.bf16.mxu0 0
        %540 = vmatpush1.bf16.msra.mxu0 0
        %541 = vmatprep.subr.bf16.mxu0 0
        %542 = vmatpush1.bf16.msra.mxu0 0
        %543 = vmatprep.subr.bf16.mxu0 0
        %544 = vmatpush1.bf16.msra.mxu0 0
        %545 = vmatprep.subr.bf16.mxu0 0
        %546 = vmatpush1.bf16.msra.mxu0 %v526
        %547 = vmatprep.subr.bf16.mxu0 0
        %548 = vmatpush2.bf16.msra.mxu0 0
        %549 = vmatprep.subr.bf16.mxu0 0
        %550 = vmatpush2.bf16.msra.mxu0 0
        %551 = vmatprep.subr.bf16.mxu0 0
        %552 = vmatpush2.bf16.msra.mxu0 0
        %553 = vmatprep.subr.bf16.mxu0 0
        %554 = vmatpush2.bf16.msra.mxu0 0
        %555 = vmatprep.subr.bf16.mxu0 0
        %556 = vmatpush2.bf16.msra.mxu0 0
        %557 = vmatprep.subr.bf16.mxu0 0
        %558 = vmatpush2.bf16.msra.mxu0 0
        %559 = vmatprep.subr.bf16.mxu0 0
        %560 = vmatpush2.bf16.msra.mxu0 0
        %561 = vmatprep.subr.bf16.mxu0 0
        %562 = vmatpush2.bf16.msra.mxu0 0
        %563 = vmatprep.mubr.bf16.mxu0 0
        %564 = vmatmul.mubr.bf16.gmra.mxu0 %v529
        %v565 = vpop.f32.mrf.mxu0
        %v566 = vadd.f32 0.0, %v565
        %v567 = vpop.f32.mrf.mxu0
        %v568 = vpop.f32.mrf.mxu0
        %v569 = vadd.f32 0.0, %v568
        %v570 = vpop.f32.mrf.mxu0
        %571 = vdwg.mxu0
        %v572 = vld [vmem:[%s339] sm:$0xff]
        %v573 = vld [vmem:[%s339 + $0x8] sm:$0xff]
        %575 = vset.pattern.permute.xlu0 0
        %576 = vperm.xlu0 %575, %v487
        %v577 = vpop.permute.xlu0 %576
        %580 = vset.pattern.permute.xlu0 0
        %581 = vperm.xlu0 %580, %v489
        %v582 = vpop.permute.xlu0 %581
        %v584 = vmul.f32 %v577, %v572
        %v585 = vmul.f32 %v582, %v573
        %v586 = vadd.f32 %v584, %v566
        %v587 = vadd.f32 %v585, %v569
        %588 = vst.msk [vmem:[%s339] sm:$0xff] %vm419, %v586
        %589 = vst.msk [vmem:[%s339 + $0x8] sm:$0xff] %vm419, %v587
        %590 = vst.msk [vmem:[#allocation2] sm:$0xff] %vm518, %v482
        %591 = vst.msk [vmem:[#allocation2 + $0x8] sm:$0xff] %vm518, %v483
        // Predicated region
        $region41: #{masked_mha_forward.3} parent=35 // pred_check
          %p592 = pneg %p391
        $region42: #{masked_mha_forward.3} parent=35 // pred_check_branch
          %594 = sbr.rel (%p592) target = $region44
        $region43: #{masked_mha_forward.3} parent=35 // pred_region
          %v595 = vld [vmem:[#allocation3] sm:$0xff]
          %v596 = vld [vmem:[#allocation3 + $0x8] sm:$0xff]
          %v597 = vrcp.pop %v595
          %v598 = vrcp.pop %v596
          %v599 = vld [vmem:[%s339] sm:$0xff]
          %v600 = vld [vmem:[%s339 + $0x8] sm:$0xff]
          %602 = vset.pattern.permute.xlu0 0
          %603 = vperm.xlu0 %602, %v597
          %v604 = vpop.permute.xlu0 %603
          %607 = vset.pattern.permute.xlu0 0
          %608 = vperm.xlu0 %607, %v598
          %v609 = vpop.permute.xlu0 %608
          %v611 = vmul.f32 %v599, %v604
          %v612 = vmul.f32 %v600, %v609
          %613 = vst.msk [vmem:[%s339] sm:$0xff] %vm419, %v611
          %614 = vst.msk [vmem:[%s339 + $0x8] sm:$0xff] %vm419, %v612
        $region44: #{masked_mha_forward.3} parent=35 // pred_fallthru
          _
        %s615 = sand.u32 %s176, 1
        %s616 = scalar_lea.sflag [#allocation5], %s615
        %s617 = sand.u32 %s176, 1
        %s618 = smul.addr %s617, 16
        %s619 = scalar_lea.vmem [#allocation4], %s618
        // Predicated region
        $region45: #{masked_mha_forward.3} parent=35 // pred_check
          %p620 = pneg %p186
        $region46: #{masked_mha_forward.3} parent=35 // pred_check_branch
          %622 = sbr.rel (%p620) target = $region48
        $region47: #{masked_mha_forward.3} parent=35 // pred_region
          %s624 = ssub.s32 256, 256
          %625 = vsyncadd %s616, %s624
          %s626 = smul.addr %s25, 2
          %s627 = sadd.s32 %s26, %s626
          %s628 = smul.addr %s24, 4
          %s629 = sadd.s32 %s627, %s628
          %s630 = smul.addr %s629, 128
          %s631 = scalar_lea.hbm %s4, %s630
          %s632 = sshll.u32 %s619, 4
          %s633 = int_to_ptr.vmem [resolvable:$true] %s632
          %638 = dma.vmem_to_hbm [thread:$0]  %s633, 256, %s631, %s616, 128, 128, 8
        $region48: #{masked_mha_forward.3} parent=35 // pred_fallthru
          _
      $region36: #{masked_mha_forward.3} parent=5 // pred_fallthru
        _
      %p639 = scmp.le.s32.totalorder 2, %s13
      // Predicated region
      $region49: #{masked_mha_forward.3} parent=5 // pred_check
        %p640 = pneg %p639
      $region50: #{masked_mha_forward.3} parent=5 // pred_check_branch
        %642 = sbr.rel (%p640) target = $region52
      $region51: #{masked_mha_forward.3} parent=5 // pred_region
        %s643 = ssub.s32 %s13, 2
        // Predicated region
        $region53: #{masked_mha_forward.3} parent=51 // pred_check
          %p644 = pneg %p192
        $region54: #{masked_mha_forward.3} parent=51 // pred_check_branch
          %646 = sbr.rel (%p644) target = $region56
        $region55: #{masked_mha_forward.3} parent=51 // pred_region
          %s647 = sand.u32 %s177, 1
          %s648 = scalar_lea.sflag [#allocation5], %s647
          %s649 = sand.u32 %s177, 1
          %s650 = smul.addr %s649, 16
          %s651 = scalar_lea.vmem [#allocation4], %s650
          %652 = dma.done %s648, 256
        $region56: #{masked_mha_forward.3} parent=51 // pred_fallthru
          _
      $region52: #{masked_mha_forward.3} parent=5 // pred_fallthru
        _
    $region6: #{masked_mha_forward.3} parent=1 // loop_footer
      %s17 = sadd.s32 1, %s13
    $region7: #{masked_mha_forward.3} parent=1 // loop_footer_branch
      %12 = sbr.rel target = $region3
    $region8: #{masked_mha_forward.3} parent=1 // loop_exit
      _
    %653 = vsyncpa [#allocation5], 1
    %s654 = scalar_lea.sflag [#allocation5], 1
    %655 = vsyncpa %s654, 1

</llo_original>
